<compile_context>
chip_gen: v6e
topology: v6e:2x2x1
jax: 0.10.0
libtpu: 0.0.40
codegen_flags: <defaults>
</compile_context>

<pallas_src>
import jax
import jax.numpy as jnp
from jax import lax
from jax.experimental import pallas as pl
from jax.experimental.pallas import tpu as pltpu

CIN, COUT, K = 3, 2, 3
Q = CIN * K * K
SLOPE = 0.33
EPS = 1e-5


def conv_bn_lrelu_kernel(w_ref, shift_ref, p_ref, o_ref):
    # w_ref:     (COUT, Q)  SMEM  conv weights with BN scale folded in
    # shift_ref: (COUT,)    SMEM  (conv_bias - running_mean)*scale + beta
    # p_ref:     (Q, L)     VMEM  im2col patch slab, lane-padded (L % 128 == 0)
    # o_ref:     (COUT, L)  VMEM  lane-dense output slab
    n_q, _ = p_ref.shape

    # Materialize each patch row once (static sublane offset); reused by BOTH
    # output channels -> 2*Q full-width scalar x vector FMAs total.
    rows = [p_ref[q:q + 1, :] for q in range(n_q)]          # each (1, L)

    outs = []
    for co in range(COUT):
        acc = w_ref[co, 0] * rows[0]
        for q in range(1, n_q):
            acc = acc + w_ref[co, q] * rows[q]
        y = acc + shift_ref[co]                              # folded bias + BN
        outs.append(jnp.where(y >= 0.0, y, SLOPE * y))       # LeakyReLU(0.33)
    o_ref[...] = jnp.concatenate(outs, axis=0)               # single lane-dense store


def mynet_forward(x, conv_w, conv_b, bn_gamma, bn_beta, bn_mean, bn_var):
    N, C, H, W = x.shape
    assert C == CIN
    Ho, Wo = H - K + 1, W - K + 1

    # Fold BatchNorm (running stats, inference semantics) into the conv:
    #   scale = gamma / sqrt(var + eps)
    #   w_eff = w * scale[co]      shift = (bias - mean) * scale + beta
    # TODO(synk): PyTorch BatchNorm2d in train() mode would use batch
    # statistics and update running stats; only inference (running-stat)
    # semantics are implemented here.
    scale = (bn_gamma / jnp.sqrt(bn_var + EPS)).astype(jnp.float32)
    shift = ((conv_b - bn_mean) * scale + bn_beta).astype(jnp.float32)
    w_eff = (conv_w.reshape(COUT, Q).astype(jnp.float32) * scale[:, None])

    # Wrapper-side im2col: one row per (ci, ky, kx), flattened over (N,Ho,Wo),
    # lane-padded to a multiple of 128.  This keeps every relayout in XLA and
    # out of the kernel.
    x = x.astype(jnp.float32)
    rows = []
    for ci in range(CIN):
        for ky in range(K):
            for kx in range(K):
                rows.append(x[:, ci, ky:ky + Ho, kx:kx + Wo].reshape(N * Ho * Wo))
    patches = jnp.stack(rows, axis=0)                         # (Q, N*Ho*Wo)
    L0 = N * Ho * Wo
    L = max(128, ((L0 + 127) // 128) * 128)
    patches = jnp.pad(patches, ((0, 0), (0, L - L0)))         # (Q, L)

    cost = pl.CostEstimate(
        flops=2 * COUT * Q * L0 + 3 * COUT * L0,
        transcendentals=0,
        bytes_accessed=4 * (Q * L + COUT * L + COUT * Q + COUT),
    )

    out_flat = pl.pallas_call(
        conv_bn_lrelu_kernel,
        out_shape=jax.ShapeDtypeStruct((COUT, L), jnp.float32),
        in_specs=[
            pl.BlockSpec(memory_space=pltpu.MemorySpace.SMEM),   # w_eff
            pl.BlockSpec(memory_space=pltpu.MemorySpace.SMEM),   # shift
            pl.BlockSpec(memory_space=pltpu.MemorySpace.VMEM),   # patch slab
        ],
        out_specs=pl.BlockSpec(memory_space=pltpu.MemorySpace.VMEM),
        cost_estimate=cost,
    )(w_eff, shift, patches)

    # Crop padded lanes and restore NCHW.
    out = out_flat[:, :L0].reshape(COUT, N, Ho, Wo)
    return jnp.transpose(out, (1, 0, 2, 3))


def reference_forward(x, conv_w, conv_b, bn_gamma, bn_beta, bn_mean, bn_var):
    y = lax.conv_general_dilated(
        x, conv_w, window_strides=(1, 1), padding="VALID",
        dimension_numbers=("NCHW", "OIHW", "NCHW"))
    y = y + conv_b[None, :, None, None]
    y = (y - bn_mean[None, :, None, None]) / jnp.sqrt(
        bn_var + EPS)[None, :, None, None]
    y = y * bn_gamma[None, :, None, None] + bn_beta[None, :, None, None]
    return jnp.where(y >= 0.0, y, SLOPE * y)


if __name__ == "__main__":
    key = jax.random.PRNGKey(0)
    kx, kw, kb, kg, kbeta, kmean = jax.random.split(key, 6)

    # input: (3, 16, 16), then unsqueeze(0) like the torch script -> (1, 3, 16, 16)
    x = jax.random.normal(kx, (CIN, 16, 16), dtype=jnp.float32)
    x = x[None, ...]

    # deterministic "normal_" parameter init (matches the shapes in __init__)
    conv_w = jax.random.normal(kw, (COUT, CIN, K, K), dtype=jnp.float32)
    conv_b = jax.random.normal(kb, (COUT,), dtype=jnp.float32)
    bn_gamma = jax.random.normal(kg, (COUT,), dtype=jnp.float32)
    bn_beta = jax.random.normal(kbeta, (COUT,), dtype=jnp.float32)
    bn_mean = jax.random.normal(kmean, (COUT,), dtype=jnp.float32)
    bn_var = jnp.full((COUT,), 2.3, dtype=jnp.float32)

    out = mynet_forward(x, conv_w, conv_b, bn_gamma, bn_beta, bn_mean, bn_var)
    out = jax.block_until_ready(out)

    ref = reference_forward(x, conv_w, conv_b, bn_gamma, bn_beta, bn_mean,
                            bn_var)
    assert out.shape == (1, COUT, 14, 14), out.shape
    assert jnp.allclose(out, ref, atol=1e-4, rtol=1e-4), (
        float(jnp.max(jnp.abs(out - ref))))
    print("KERNEL_OK")
</pallas_src>

<mosaic_0001>
module attributes {stable_mosaic.version = 11 : i64} {
  func.func @conv_bn_lrelu_kernel(%arg0: memref<2x27xf32, #tpu.memory_space<smem>>, %arg1: memref<2xf32, #tpu.memory_space<smem>>, %arg2: memref<27x256xf32, #tpu.memory_space<vmem>>, %arg3: memref<2x256xf32, #tpu.memory_space<vmem>>) attributes {dimension_semantics = [], scalar_prefetch = 0 : i64, scratch_operands = 0 : i64, tpu.core_type = #tpu.core_type<tc>} {
    %c0 = arith.constant 0 : index
    %c0_0 = arith.constant 0 : index
    %0 = vector.load %arg2[%c0, %c0_0] : memref<27x256xf32, #tpu.memory_space<vmem>>, vector<1x256xf32>
    %c1 = arith.constant 1 : index
    %c0_1 = arith.constant 0 : index
    %1 = vector.load %arg2[%c1, %c0_1] : memref<27x256xf32, #tpu.memory_space<vmem>>, vector<1x256xf32>
    %c2 = arith.constant 2 : index
    %c0_2 = arith.constant 0 : index
    %2 = vector.load %arg2[%c2, %c0_2] : memref<27x256xf32, #tpu.memory_space<vmem>>, vector<1x256xf32>
    %c3 = arith.constant 3 : index
    %c0_3 = arith.constant 0 : index
    %3 = vector.load %arg2[%c3, %c0_3] : memref<27x256xf32, #tpu.memory_space<vmem>>, vector<1x256xf32>
    %c4 = arith.constant 4 : index
    %c0_4 = arith.constant 0 : index
    %4 = vector.load %arg2[%c4, %c0_4] : memref<27x256xf32, #tpu.memory_space<vmem>>, vector<1x256xf32>
    %c5 = arith.constant 5 : index
    %c0_5 = arith.constant 0 : index
    %5 = vector.load %arg2[%c5, %c0_5] : memref<27x256xf32, #tpu.memory_space<vmem>>, vector<1x256xf32>
    %c6 = arith.constant 6 : index
    %c0_6 = arith.constant 0 : index
    %6 = vector.load %arg2[%c6, %c0_6] : memref<27x256xf32, #tpu.memory_space<vmem>>, vector<1x256xf32>
    %c7 = arith.constant 7 : index
    %c0_7 = arith.constant 0 : index
    %7 = vector.load %arg2[%c7, %c0_7] : memref<27x256xf32, #tpu.memory_space<vmem>>, vector<1x256xf32>
    %c8 = arith.constant 8 : index
    %c0_8 = arith.constant 0 : index
    %8 = vector.load %arg2[%c8, %c0_8] : memref<27x256xf32, #tpu.memory_space<vmem>>, vector<1x256xf32>
    %c9 = arith.constant 9 : index
    %c0_9 = arith.constant 0 : index
    %9 = vector.load %arg2[%c9, %c0_9] : memref<27x256xf32, #tpu.memory_space<vmem>>, vector<1x256xf32>
    %c10 = arith.constant 10 : index
    %c0_10 = arith.constant 0 : index
    %10 = vector.load %arg2[%c10, %c0_10] : memref<27x256xf32, #tpu.memory_space<vmem>>, vector<1x256xf32>
    %c11 = arith.constant 11 : index
    %c0_11 = arith.constant 0 : index
    %11 = vector.load %arg2[%c11, %c0_11] : memref<27x256xf32, #tpu.memory_space<vmem>>, vector<1x256xf32>
    %c12 = arith.constant 12 : index
    %c0_12 = arith.constant 0 : index
    %12 = vector.load %arg2[%c12, %c0_12] : memref<27x256xf32, #tpu.memory_space<vmem>>, vector<1x256xf32>
    %c13 = arith.constant 13 : index
    %c0_13 = arith.constant 0 : index
    %13 = vector.load %arg2[%c13, %c0_13] : memref<27x256xf32, #tpu.memory_space<vmem>>, vector<1x256xf32>
    %c14 = arith.constant 14 : index
    %c0_14 = arith.constant 0 : index
    %14 = vector.load %arg2[%c14, %c0_14] : memref<27x256xf32, #tpu.memory_space<vmem>>, vector<1x256xf32>
    %c15 = arith.constant 15 : index
    %c0_15 = arith.constant 0 : index
    %15 = vector.load %arg2[%c15, %c0_15] : memref<27x256xf32, #tpu.memory_space<vmem>>, vector<1x256xf32>
    %c16 = arith.constant 16 : index
    %c0_16 = arith.constant 0 : index
    %16 = vector.load %arg2[%c16, %c0_16] : memref<27x256xf32, #tpu.memory_space<vmem>>, vector<1x256xf32>
    %c17 = arith.constant 17 : index
    %c0_17 = arith.constant 0 : index
    %17 = vector.load %arg2[%c17, %c0_17] : memref<27x256xf32, #tpu.memory_space<vmem>>, vector<1x256xf32>
    %c18 = arith.constant 18 : index
    %c0_18 = arith.constant 0 : index
    %18 = vector.load %arg2[%c18, %c0_18] : memref<27x256xf32, #tpu.memory_space<vmem>>, vector<1x256xf32>
    %c19 = arith.constant 19 : index
    %c0_19 = arith.constant 0 : index
    %19 = vector.load %arg2[%c19, %c0_19] : memref<27x256xf32, #tpu.memory_space<vmem>>, vector<1x256xf32>
    %c20 = arith.constant 20 : index
    %c0_20 = arith.constant 0 : index
    %20 = vector.load %arg2[%c20, %c0_20] : memref<27x256xf32, #tpu.memory_space<vmem>>, vector<1x256xf32>
    %c21 = arith.constant 21 : index
    %c0_21 = arith.constant 0 : index
    %21 = vector.load %arg2[%c21, %c0_21] : memref<27x256xf32, #tpu.memory_space<vmem>>, vector<1x256xf32>
    %c22 = arith.constant 22 : index
    %c0_22 = arith.constant 0 : index
    %22 = vector.load %arg2[%c22, %c0_22] : memref<27x256xf32, #tpu.memory_space<vmem>>, vector<1x256xf32>
    %c23 = arith.constant 23 : index
    %c0_23 = arith.constant 0 : index
    %23 = vector.load %arg2[%c23, %c0_23] : memref<27x256xf32, #tpu.memory_space<vmem>>, vector<1x256xf32>
    %c24 = arith.constant 24 : index
    %c0_24 = arith.constant 0 : index
    %24 = vector.load %arg2[%c24, %c0_24] : memref<27x256xf32, #tpu.memory_space<vmem>>, vector<1x256xf32>
    %c25 = arith.constant 25 : index
    %c0_25 = arith.constant 0 : index
    %25 = vector.load %arg2[%c25, %c0_25] : memref<27x256xf32, #tpu.memory_space<vmem>>, vector<1x256xf32>
    %c26 = arith.constant 26 : index
    %c0_26 = arith.constant 0 : index
    %26 = vector.load %arg2[%c26, %c0_26] : memref<27x256xf32, #tpu.memory_space<vmem>>, vector<1x256xf32>
    %c0_27 = arith.constant 0 : index
    %c0_28 = arith.constant 0 : index
    %27 = memref.load %arg0[%c0_27, %c0_28] : memref<2x27xf32, #tpu.memory_space<smem>>
    %28 = vector.broadcast %27 : f32 to vector<1x256xf32>
    %29 = arith.mulf %28, %0 : vector<1x256xf32>
    %c0_29 = arith.constant 0 : index
    %c1_30 = arith.constant 1 : index
    %30 = memref.load %arg0[%c0_29, %c1_30] : memref<2x27xf32, #tpu.memory_space<smem>>
    %31 = vector.broadcast %30 : f32 to vector<1x256xf32>
    %32 = arith.mulf %31, %1 : vector<1x256xf32>
    %33 = arith.addf %29, %32 : vector<1x256xf32>
    %c0_31 = arith.constant 0 : index
    %c2_32 = arith.constant 2 : index
    %34 = memref.load %arg0[%c0_31, %c2_32] : memref<2x27xf32, #tpu.memory_space<smem>>
    %35 = vector.broadcast %34 : f32 to vector<1x256xf32>
    %36 = arith.mulf %35, %2 : vector<1x256xf32>
    %37 = arith.addf %33, %36 : vector<1x256xf32>
    %c0_33 = arith.constant 0 : index
    %c3_34 = arith.constant 3 : index
    %38 = memref.load %arg0[%c0_33, %c3_34] : memref<2x27xf32, #tpu.memory_space<smem>>
    %39 = vector.broadcast %38 : f32 to vector<1x256xf32>
    %40 = arith.mulf %39, %3 : vector<1x256xf32>
    %41 = arith.addf %37, %40 : vector<1x256xf32>
    %c0_35 = arith.constant 0 : index
    %c4_36 = arith.constant 4 : index
    %42 = memref.load %arg0[%c0_35, %c4_36] : memref<2x27xf32, #tpu.memory_space<smem>>
    %43 = vector.broadcast %42 : f32 to vector<1x256xf32>
    %44 = arith.mulf %43, %4 : vector<1x256xf32>
    %45 = arith.addf %41, %44 : vector<1x256xf32>
    %c0_37 = arith.constant 0 : index
    %c5_38 = arith.constant 5 : index
    %46 = memref.load %arg0[%c0_37, %c5_38] : memref<2x27xf32, #tpu.memory_space<smem>>
    %47 = vector.broadcast %46 : f32 to vector<1x256xf32>
    %48 = arith.mulf %47, %5 : vector<1x256xf32>
    %49 = arith.addf %45, %48 : vector<1x256xf32>
    %c0_39 = arith.constant 0 : index
    %c6_40 = arith.constant 6 : index
    %50 = memref.load %arg0[%c0_39, %c6_40] : memref<2x27xf32, #tpu.memory_space<smem>>
    %51 = vector.broadcast %50 : f32 to vector<1x256xf32>
    %52 = arith.mulf %51, %6 : vector<1x256xf32>
    %53 = arith.addf %49, %52 : vector<1x256xf32>
    %c0_41 = arith.constant 0 : index
    %c7_42 = arith.constant 7 : index
    %54 = memref.load %arg0[%c0_41, %c7_42] : memref<2x27xf32, #tpu.memory_space<smem>>
    %55 = vector.broadcast %54 : f32 to vector<1x256xf32>
    %56 = arith.mulf %55, %7 : vector<1x256xf32>
    %57 = arith.addf %53, %56 : vector<1x256xf32>
    %c0_43 = arith.constant 0 : index
    %c8_44 = arith.constant 8 : index
    %58 = memref.load %arg0[%c0_43, %c8_44] : memref<2x27xf32, #tpu.memory_space<smem>>
    %59 = vector.broadcast %58 : f32 to vector<1x256xf32>
    %60 = arith.mulf %59, %8 : vector<1x256xf32>
    %61 = arith.addf %57, %60 : vector<1x256xf32>
    %c0_45 = arith.constant 0 : index
    %c9_46 = arith.constant 9 : index
    %62 = memref.load %arg0[%c0_45, %c9_46] : memref<2x27xf32, #tpu.memory_space<smem>>
    %63 = vector.broadcast %62 : f32 to vector<1x256xf32>
    %64 = arith.mulf %63, %9 : vector<1x256xf32>
    %65 = arith.addf %61, %64 : vector<1x256xf32>
    %c0_47 = arith.constant 0 : index
    %c10_48 = arith.constant 10 : index
    %66 = memref.load %arg0[%c0_47, %c10_48] : memref<2x27xf32, #tpu.memory_space<smem>>
    %67 = vector.broadcast %66 : f32 to vector<1x256xf32>
    %68 = arith.mulf %67, %10 : vector<1x256xf32>
    %69 = arith.addf %65, %68 : vector<1x256xf32>
    %c0_49 = arith.constant 0 : index
    %c11_50 = arith.constant 11 : index
    %70 = memref.load %arg0[%c0_49, %c11_50] : memref<2x27xf32, #tpu.memory_space<smem>>
    %71 = vector.broadcast %70 : f32 to vector<1x256xf32>
    %72 = arith.mulf %71, %11 : vector<1x256xf32>
    %73 = arith.addf %69, %72 : vector<1x256xf32>
    %c0_51 = arith.constant 0 : index
    %c12_52 = arith.constant 12 : index
    %74 = memref.load %arg0[%c0_51, %c12_52] : memref<2x27xf32, #tpu.memory_space<smem>>
    %75 = vector.broadcast %74 : f32 to vector<1x256xf32>
    %76 = arith.mulf %75, %12 : vector<1x256xf32>
    %77 = arith.addf %73, %76 : vector<1x256xf32>
    %c0_53 = arith.constant 0 : index
    %c13_54 = arith.constant 13 : index
    %78 = memref.load %arg0[%c0_53, %c13_54] : memref<2x27xf32, #tpu.memory_space<smem>>
    %79 = vector.broadcast %78 : f32 to vector<1x256xf32>
    %80 = arith.mulf %79, %13 : vector<1x256xf32>
    %81 = arith.addf %77, %80 : vector<1x256xf32>
    %c0_55 = arith.constant 0 : index
    %c14_56 = arith.constant 14 : index
    %82 = memref.load %arg0[%c0_55, %c14_56] : memref<2x27xf32, #tpu.memory_space<smem>>
    %83 = vector.broadcast %82 : f32 to vector<1x256xf32>
    %84 = arith.mulf %83, %14 : vector<1x256xf32>
    %85 = arith.addf %81, %84 : vector<1x256xf32>
    %c0_57 = arith.constant 0 : index
    %c15_58 = arith.constant 15 : index
    %86 = memref.load %arg0[%c0_57, %c15_58] : memref<2x27xf32, #tpu.memory_space<smem>>
    %87 = vector.broadcast %86 : f32 to vector<1x256xf32>
    %88 = arith.mulf %87, %15 : vector<1x256xf32>
    %89 = arith.addf %85, %88 : vector<1x256xf32>
    %c0_59 = arith.constant 0 : index
    %c16_60 = arith.constant 16 : index
    %90 = memref.load %arg0[%c0_59, %c16_60] : memref<2x27xf32, #tpu.memory_space<smem>>
    %91 = vector.broadcast %90 : f32 to vector<1x256xf32>
    %92 = arith.mulf %91, %16 : vector<1x256xf32>
    %93 = arith.addf %89, %92 : vector<1x256xf32>
    %c0_61 = arith.constant 0 : index
    %c17_62 = arith.constant 17 : index
    %94 = memref.load %arg0[%c0_61, %c17_62] : memref<2x27xf32, #tpu.memory_space<smem>>
    %95 = vector.broadcast %94 : f32 to vector<1x256xf32>
    %96 = arith.mulf %95, %17 : vector<1x256xf32>
    %97 = arith.addf %93, %96 : vector<1x256xf32>
    %c0_63 = arith.constant 0 : index
    %c18_64 = arith.constant 18 : index
    %98 = memref.load %arg0[%c0_63, %c18_64] : memref<2x27xf32, #tpu.memory_space<smem>>
    %99 = vector.broadcast %98 : f32 to vector<1x256xf32>
    %100 = arith.mulf %99, %18 : vector<1x256xf32>
    %101 = arith.addf %97, %100 : vector<1x256xf32>
    %c0_65 = arith.constant 0 : index
    %c19_66 = arith.constant 19 : index
    %102 = memref.load %arg0[%c0_65, %c19_66] : memref<2x27xf32, #tpu.memory_space<smem>>
    %103 = vector.broadcast %102 : f32 to vector<1x256xf32>
    %104 = arith.mulf %103, %19 : vector<1x256xf32>
    %105 = arith.addf %101, %104 : vector<1x256xf32>
    %c0_67 = arith.constant 0 : index
    %c20_68 = arith.constant 20 : index
    %106 = memref.load %arg0[%c0_67, %c20_68] : memref<2x27xf32, #tpu.memory_space<smem>>
    %107 = vector.broadcast %106 : f32 to vector<1x256xf32>
    %108 = arith.mulf %107, %20 : vector<1x256xf32>
    %109 = arith.addf %105, %108 : vector<1x256xf32>
    %c0_69 = arith.constant 0 : index
    %c21_70 = arith.constant 21 : index
    %110 = memref.load %arg0[%c0_69, %c21_70] : memref<2x27xf32, #tpu.memory_space<smem>>
    %111 = vector.broadcast %110 : f32 to vector<1x256xf32>
    %112 = arith.mulf %111, %21 : vector<1x256xf32>
    %113 = arith.addf %109, %112 : vector<1x256xf32>
    %c0_71 = arith.constant 0 : index
    %c22_72 = arith.constant 22 : index
    %114 = memref.load %arg0[%c0_71, %c22_72] : memref<2x27xf32, #tpu.memory_space<smem>>
    %115 = vector.broadcast %114 : f32 to vector<1x256xf32>
    %116 = arith.mulf %115, %22 : vector<1x256xf32>
    %117 = arith.addf %113, %116 : vector<1x256xf32>
    %c0_73 = arith.constant 0 : index
    %c23_74 = arith.constant 23 : index
    %118 = memref.load %arg0[%c0_73, %c23_74] : memref<2x27xf32, #tpu.memory_space<smem>>
    %119 = vector.broadcast %118 : f32 to vector<1x256xf32>
    %120 = arith.mulf %119, %23 : vector<1x256xf32>
    %121 = arith.addf %117, %120 : vector<1x256xf32>
    %c0_75 = arith.constant 0 : index
    %c24_76 = arith.constant 24 : index
    %122 = memref.load %arg0[%c0_75, %c24_76] : memref<2x27xf32, #tpu.memory_space<smem>>
    %123 = vector.broadcast %122 : f32 to vector<1x256xf32>
    %124 = arith.mulf %123, %24 : vector<1x256xf32>
    %125 = arith.addf %121, %124 : vector<1x256xf32>
    %c0_77 = arith.constant 0 : index
    %c25_78 = arith.constant 25 : index
    %126 = memref.load %arg0[%c0_77, %c25_78] : memref<2x27xf32, #tpu.memory_space<smem>>
    %127 = vector.broadcast %126 : f32 to vector<1x256xf32>
    %128 = arith.mulf %127, %25 : vector<1x256xf32>
    %129 = arith.addf %125, %128 : vector<1x256xf32>
    %c0_79 = arith.constant 0 : index
    %c26_80 = arith.constant 26 : index
    %130 = memref.load %arg0[%c0_79, %c26_80] : memref<2x27xf32, #tpu.memory_space<smem>>
    %131 = vector.broadcast %130 : f32 to vector<1x256xf32>
    %132 = arith.mulf %131, %26 : vector<1x256xf32>
    %133 = arith.addf %129, %132 : vector<1x256xf32>
    %c0_81 = arith.constant 0 : index
    %134 = memref.load %arg1[%c0_81] : memref<2xf32, #tpu.memory_space<smem>>
    %135 = vector.broadcast %134 : f32 to vector<1x256xf32>
    %136 = arith.addf %133, %135 : vector<1x256xf32>
    %cst = arith.constant 0.000000e+00 : f32
    %137 = vector.broadcast %cst : f32 to vector<1x256xf32>
    %138 = arith.cmpf oge, %136, %137 : vector<1x256xf32>
    %cst_82 = arith.constant 3.300000e-01 : f32
    %139 = vector.broadcast %cst_82 : f32 to vector<1x256xf32>
    %140 = arith.mulf %139, %136 : vector<1x256xf32>
    %141 = arith.select %138, %136, %140 : vector<1x256xi1>, vector<1x256xf32>
    %c1_83 = arith.constant 1 : index
    %c0_84 = arith.constant 0 : index
    %142 = memref.load %arg0[%c1_83, %c0_84] : memref<2x27xf32, #tpu.memory_space<smem>>
    %143 = vector.broadcast %142 : f32 to vector<1x256xf32>
    %144 = arith.mulf %143, %0 : vector<1x256xf32>
    %c1_85 = arith.constant 1 : index
    %c1_86 = arith.constant 1 : index
    %145 = memref.load %arg0[%c1_85, %c1_86] : memref<2x27xf32, #tpu.memory_space<smem>>
    %146 = vector.broadcast %145 : f32 to vector<1x256xf32>
    %147 = arith.mulf %146, %1 : vector<1x256xf32>
    %148 = arith.addf %144, %147 : vector<1x256xf32>
    %c1_87 = arith.constant 1 : index
    %c2_88 = arith.constant 2 : index
    %149 = memref.load %arg0[%c1_87, %c2_88] : memref<2x27xf32, #tpu.memory_space<smem>>
    %150 = vector.broadcast %149 : f32 to vector<1x256xf32>
    %151 = arith.mulf %150, %2 : vector<1x256xf32>
    %152 = arith.addf %148, %151 : vector<1x256xf32>
    %c1_89 = arith.constant 1 : index
    %c3_90 = arith.constant 3 : index
    %153 = memref.load %arg0[%c1_89, %c3_90] : memref<2x27xf32, #tpu.memory_space<smem>>
    %154 = vector.broadcast %153 : f32 to vector<1x256xf32>
    %155 = arith.mulf %154, %3 : vector<1x256xf32>
    %156 = arith.addf %152, %155 : vector<1x256xf32>
    %c1_91 = arith.constant 1 : index
    %c4_92 = arith.constant 4 : index
    %157 = memref.load %arg0[%c1_91, %c4_92] : memref<2x27xf32, #tpu.memory_space<smem>>
    %158 = vector.broadcast %157 : f32 to vector<1x256xf32>
    %159 = arith.mulf %158, %4 : vector<1x256xf32>
    %160 = arith.addf %156, %159 : vector<1x256xf32>
    %c1_93 = arith.constant 1 : index
    %c5_94 = arith.constant 5 : index
    %161 = memref.load %arg0[%c1_93, %c5_94] : memref<2x27xf32, #tpu.memory_space<smem>>
    %162 = vector.broadcast %161 : f32 to vector<1x256xf32>
    %163 = arith.mulf %162, %5 : vector<1x256xf32>
    %164 = arith.addf %160, %163 : vector<1x256xf32>
    %c1_95 = arith.constant 1 : index
    %c6_96 = arith.constant 6 : index
    %165 = memref.load %arg0[%c1_95, %c6_96] : memref<2x27xf32, #tpu.memory_space<smem>>
    %166 = vector.broadcast %165 : f32 to vector<1x256xf32>
    %167 = arith.mulf %166, %6 : vector<1x256xf32>
    %168 = arith.addf %164, %167 : vector<1x256xf32>
    %c1_97 = arith.constant 1 : index
    %c7_98 = arith.constant 7 : index
    %169 = memref.load %arg0[%c1_97, %c7_98] : memref<2x27xf32, #tpu.memory_space<smem>>
    %170 = vector.broadcast %169 : f32 to vector<1x256xf32>
    %171 = arith.mulf %170, %7 : vector<1x256xf32>
    %172 = arith.addf %168, %171 : vector<1x256xf32>
    %c1_99 = arith.constant 1 : index
    %c8_100 = arith.constant 8 : index
    %173 = memref.load %arg0[%c1_99, %c8_100] : memref<2x27xf32, #tpu.memory_space<smem>>
    %174 = vector.broadcast %173 : f32 to vector<1x256xf32>
    %175 = arith.mulf %174, %8 : vector<1x256xf32>
    %176 = arith.addf %172, %175 : vector<1x256xf32>
    %c1_101 = arith.constant 1 : index
    %c9_102 = arith.constant 9 : index
    %177 = memref.load %arg0[%c1_101, %c9_102] : memref<2x27xf32, #tpu.memory_space<smem>>
    %178 = vector.broadcast %177 : f32 to vector<1x256xf32>
    %179 = arith.mulf %178, %9 : vector<1x256xf32>
    %180 = arith.addf %176, %179 : vector<1x256xf32>
    %c1_103 = arith.constant 1 : index
    %c10_104 = arith.constant 10 : index
    %181 = memref.load %arg0[%c1_103, %c10_104] : memref<2x27xf32, #tpu.memory_space<smem>>
    %182 = vector.broadcast %181 : f32 to vector<1x256xf32>
    %183 = arith.mulf %182, %10 : vector<1x256xf32>
    %184 = arith.addf %180, %183 : vector<1x256xf32>
    %c1_105 = arith.constant 1 : index
    %c11_106 = arith.constant 11 : index
    %185 = memref.load %arg0[%c1_105, %c11_106] : memref<2x27xf32, #tpu.memory_space<smem>>
    %186 = vector.broadcast %185 : f32 to vector<1x256xf32>
    %187 = arith.mulf %186, %11 : vector<1x256xf32>
    %188 = arith.addf %184, %187 : vector<1x256xf32>
    %c1_107 = arith.constant 1 : index
    %c12_108 = arith.constant 12 : index
    %189 = memref.load %arg0[%c1_107, %c12_108] : memref<2x27xf32, #tpu.memory_space<smem>>
    %190 = vector.broadcast %189 : f32 to vector<1x256xf32>
    %191 = arith.mulf %190, %12 : vector<1x256xf32>
    %192 = arith.addf %188, %191 : vector<1x256xf32>
    %c1_109 = arith.constant 1 : index
    %c13_110 = arith.constant 13 : index
    %193 = memref.load %arg0[%c1_109, %c13_110] : memref<2x27xf32, #tpu.memory_space<smem>>
    %194 = vector.broadcast %193 : f32 to vector<1x256xf32>
    %195 = arith.mulf %194, %13 : vector<1x256xf32>
    %196 = arith.addf %192, %195 : vector<1x256xf32>
    %c1_111 = arith.constant 1 : index
    %c14_112 = arith.constant 14 : index
    %197 = memref.load %arg0[%c1_111, %c14_112] : memref<2x27xf32, #tpu.memory_space<smem>>
    %198 = vector.broadcast %197 : f32 to vector<1x256xf32>
    %199 = arith.mulf %198, %14 : vector<1x256xf32>
    %200 = arith.addf %196, %199 : vector<1x256xf32>
    %c1_113 = arith.constant 1 : index
    %c15_114 = arith.constant 15 : index
    %201 = memref.load %arg0[%c1_113, %c15_114] : memref<2x27xf32, #tpu.memory_space<smem>>
    %202 = vector.broadcast %201 : f32 to vector<1x256xf32>
    %203 = arith.mulf %202, %15 : vector<1x256xf32>
    %204 = arith.addf %200, %203 : vector<1x256xf32>
    %c1_115 = arith.constant 1 : index
    %c16_116 = arith.constant 16 : index
    %205 = memref.load %arg0[%c1_115, %c16_116] : memref<2x27xf32, #tpu.memory_space<smem>>
    %206 = vector.broadcast %205 : f32 to vector<1x256xf32>
    %207 = arith.mulf %206, %16 : vector<1x256xf32>
    %208 = arith.addf %204, %207 : vector<1x256xf32>
    %c1_117 = arith.constant 1 : index
    %c17_118 = arith.constant 17 : index
    %209 = memref.load %arg0[%c1_117, %c17_118] : memref<2x27xf32, #tpu.memory_space<smem>>
    %210 = vector.broadcast %209 : f32 to vector<1x256xf32>
    %211 = arith.mulf %210, %17 : vector<1x256xf32>
    %212 = arith.addf %208, %211 : vector<1x256xf32>
    %c1_119 = arith.constant 1 : index
    %c18_120 = arith.constant 18 : index
    %213 = memref.load %arg0[%c1_119, %c18_120] : memref<2x27xf32, #tpu.memory_space<smem>>
    %214 = vector.broadcast %213 : f32 to vector<1x256xf32>
    %215 = arith.mulf %214, %18 : vector<1x256xf32>
    %216 = arith.addf %212, %215 : vector<1x256xf32>
    %c1_121 = arith.constant 1 : index
    %c19_122 = arith.constant 19 : index
    %217 = memref.load %arg0[%c1_121, %c19_122] : memref<2x27xf32, #tpu.memory_space<smem>>
    %218 = vector.broadcast %217 : f32 to vector<1x256xf32>
    %219 = arith.mulf %218, %19 : vector<1x256xf32>
    %220 = arith.addf %216, %219 : vector<1x256xf32>
    %c1_123 = arith.constant 1 : index
    %c20_124 = arith.constant 20 : index
    %221 = memref.load %arg0[%c1_123, %c20_124] : memref<2x27xf32, #tpu.memory_space<smem>>
    %222 = vector.broadcast %221 : f32 to vector<1x256xf32>
    %223 = arith.mulf %222, %20 : vector<1x256xf32>
    %224 = arith.addf %220, %223 : vector<1x256xf32>
    %c1_125 = arith.constant 1 : index
    %c21_126 = arith.constant 21 : index
    %225 = memref.load %arg0[%c1_125, %c21_126] : memref<2x27xf32, #tpu.memory_space<smem>>
    %226 = vector.broadcast %225 : f32 to vector<1x256xf32>
    %227 = arith.mulf %226, %21 : vector<1x256xf32>
    %228 = arith.addf %224, %227 : vector<1x256xf32>
    %c1_127 = arith.constant 1 : index
    %c22_128 = arith.constant 22 : index
    %229 = memref.load %arg0[%c1_127, %c22_128] : memref<2x27xf32, #tpu.memory_space<smem>>
    %230 = vector.broadcast %229 : f32 to vector<1x256xf32>
    %231 = arith.mulf %230, %22 : vector<1x256xf32>
    %232 = arith.addf %228, %231 : vector<1x256xf32>
    %c1_129 = arith.constant 1 : index
    %c23_130 = arith.constant 23 : index
    %233 = memref.load %arg0[%c1_129, %c23_130] : memref<2x27xf32, #tpu.memory_space<smem>>
    %234 = vector.broadcast %233 : f32 to vector<1x256xf32>
    %235 = arith.mulf %234, %23 : vector<1x256xf32>
    %236 = arith.addf %232, %235 : vector<1x256xf32>
    %c1_131 = arith.constant 1 : index
    %c24_132 = arith.constant 24 : index
    %237 = memref.load %arg0[%c1_131, %c24_132] : memref<2x27xf32, #tpu.memory_space<smem>>
    %238 = vector.broadcast %237 : f32 to vector<1x256xf32>
    %239 = arith.mulf %238, %24 : vector<1x256xf32>
    %240 = arith.addf %236, %239 : vector<1x256xf32>
    %c1_133 = arith.constant 1 : index
    %c25_134 = arith.constant 25 : index
    %241 = memref.load %arg0[%c1_133, %c25_134] : memref<2x27xf32, #tpu.memory_space<smem>>
    %242 = vector.broadcast %241 : f32 to vector<1x256xf32>
    %243 = arith.mulf %242, %25 : vector<1x256xf32>
    %244 = arith.addf %240, %243 : vector<1x256xf32>
    %c1_135 = arith.constant 1 : index
    %c26_136 = arith.constant 26 : index
    %245 = memref.load %arg0[%c1_135, %c26_136] : memref<2x27xf32, #tpu.memory_space<smem>>
    %246 = vector.broadcast %245 : f32 to vector<1x256xf32>
    %247 = arith.mulf %246, %26 : vector<1x256xf32>
    %248 = arith.addf %244, %247 : vector<1x256xf32>
    %c1_137 = arith.constant 1 : index
    %249 = memref.load %arg1[%c1_137] : memref<2xf32, #tpu.memory_space<smem>>
    %250 = vector.broadcast %249 : f32 to vector<1x256xf32>
    %251 = arith.addf %248, %250 : vector<1x256xf32>
    %cst_138 = arith.constant 0.000000e+00 : f32
    %252 = vector.broadcast %cst_138 : f32 to vector<1x256xf32>
    %253 = arith.cmpf oge, %251, %252 : vector<1x256xf32>
    %cst_139 = arith.constant 3.300000e-01 : f32
    %254 = vector.broadcast %cst_139 : f32 to vector<1x256xf32>
    %255 = arith.mulf %254, %251 : vector<1x256xf32>
    %256 = arith.select %253, %251, %255 : vector<1x256xi1>, vector<1x256xf32>
    %257 = tpu.concatenate %141, %256 in 0 : vector<1x256xf32>, vector<1x256xf32> -> vector<2x256xf32>
    %c0_140 = arith.constant 0 : index
    %c0_141 = arith.constant 0 : index
    %258 = vector.load %arg3[%c0_140, %c0_141] : memref<2x256xf32, #tpu.memory_space<vmem>>, vector<2x256xf32>
    tpu.vector_store %arg3[%c0_140, %c0_141], %257 {strides = array<i32>} : memref<2x256xf32, #tpu.memory_space<vmem>>, vector<2x256xf32>,
    return
  }
}

</mosaic_0001>

<llo_original>
// kernel: tpu_custom_call.1
$region0: #{tpu_custom_call.1}
  #allocation0 [shape = 'u32[]', space=smem, size = 0x4, offset = 0x4, fixed_abs, tag = 'smem constant byte address 0x4 - core index']
  #allocation1 [shape = 'u32[144,128]{1,0:T(1,128)}', space=vmem, size = 0x12000, scoped, tag = 'internal scratch']
  %s0 = inlined_call_operand.hbm [shape: f32[2,27], index: 0, kind: input, shape index: {}]
  %s1 = inlined_call_operand.vmem [shape: f32[2], index: 1, kind: input, shape index: {}]
  %s2 = inlined_call_operand.hbm [shape: f32[27,256], index: 2, kind: input, shape index: {}]
  %s3 = inlined_call_operand.hbm [shape: f32[2,256], index: 3, kind: output, shape index: {}]
  %s4 = sld [smem:[#allocation0]]
  $region34: #{tpu_custom_call.1} parent=0
    _
  %s6 = ssub.s32 1, %s4
  %s7 = scalar_select 0, %s6, %s4
  $region1: #{tpu_custom_call.1} parent=0
    #allocation2 [shape = 'u8[1024]{0}', space=smem, size = 0x400, scoped, tag = 'input window, operand 0, single buffered']
    #allocation3 [shape = 's32[1]{0}', space=sflag, size = 0x4, scoped, tag = 'scoped memory for tpu_custom_call.1']
    #allocation4 [shape = 's32[1]{0}', space=sflag, size = 0x4, scoped, tag = 'scoped memory for tpu_custom_call.1']
    #allocation5 [shape = 's32[1]{0}', space=sflag, size = 0x4, scoped, tag = 'scoped memory for tpu_custom_call.1']
    #allocation6 [shape = 's32[1]{0}', space=sflag, size = 0x4, scoped, tag = 'scoped memory for tpu_custom_call.1']
    #allocation7 [shape = 'u8[512]{0}', space=smem, size = 0x200, scoped, tag = 'input window, operand 1, single buffered']
    #allocation8 [shape = 'u8[32768]{0}', space=vmem, size = 0x8000, scoped, tag = 'input window, operand 2, single buffered']
    #allocation9 [shape = 'u8[2048]{0}', space=vmem, size = 0x800, scoped, tag = 'output window, operand 0, single buffered']
    %8 = vsyncpa [#allocation5], 0
    %9 = vsyncpa [#allocation6], 0
    %10 = vsyncpa [#allocation3], 0
    %11 = vsyncpa [#allocation4], 0
    // Predicated region
    $region2: #{tpu_custom_call.1} parent=1 // pred_check
      _
    $region3: #{tpu_custom_call.1} parent=1 // pred_check_branch
      %13 = sbr.rel (0) target = $region5
    $region4: #{tpu_custom_call.1} parent=1 // pred_region
      %s15 = ssub.s32 32, 32
      %16 = vsyncadd [#allocation5], %s15
      %19 = dma.hbm_to_smem %s0, 32, [#allocation2], [#allocation5]
    $region5: #{tpu_custom_call.1} parent=1 // pred_fallthru
      _
    // Predicated region
    $region6: #{tpu_custom_call.1} parent=1 // pred_check
      _
    $region7: #{tpu_custom_call.1} parent=1 // pred_check_branch
      %21 = sbr.rel (0) target = $region9
    $region8: #{tpu_custom_call.1} parent=1 // pred_region
      %s23 = ssub.s32 16, 16
      %24 = vsyncadd [#allocation6], %s23
      %s26 = sshll.u32 %s1, 4
      %s27 = int_to_ptr.vmem [resolvable:$true] %s26
      %29 = dma.vmem_to_smem %s27, 16, [#allocation7], [#allocation6]
    $region9: #{tpu_custom_call.1} parent=1 // pred_fallthru
      _
    // Predicated region
    $region10: #{tpu_custom_call.1} parent=1 // pred_check
      _
    $region11: #{tpu_custom_call.1} parent=1 // pred_check_branch
      %31 = sbr.rel (0) target = $region13
    $region12: #{tpu_custom_call.1} parent=1 // pred_region
      %s33 = ssub.s32 1024, 1024
      %34 = vsyncadd [#allocation3], %s33
      %s35 = sshll.u32 [#allocation8], 4
      %s36 = int_to_ptr.vmem [resolvable:$true] %s35
      %41 = dma.hbm_to_vmem [thread:$0]  %s2, 1024, %s36, [#allocation3], 256, 256, 16
    $region13: #{tpu_custom_call.1} parent=1 // pred_fallthru
      _
    // Predicated region
    $region14: #{tpu_custom_call.1} parent=1 // pred_check
      _
    $region15: #{tpu_custom_call.1} parent=1 // pred_check_branch
      %43 = sbr.rel (0) target = $region17
    $region16: #{tpu_custom_call.1} parent=1 // pred_region
      %44 = dma.done [#allocation5], 32
    $region17: #{tpu_custom_call.1} parent=1 // pred_fallthru
      _
    // Predicated region
    $region18: #{tpu_custom_call.1} parent=1 // pred_check
      _
    $region19: #{tpu_custom_call.1} parent=1 // pred_check_branch
      %46 = sbr.rel (0) target = $region21
    $region20: #{tpu_custom_call.1} parent=1 // pred_region
      %47 = dma.done [#allocation6], 16
    $region21: #{tpu_custom_call.1} parent=1 // pred_fallthru
      _
    // Predicated region
    $region22: #{tpu_custom_call.1} parent=1 // pred_check
      _
    $region23: #{tpu_custom_call.1} parent=1 // pred_check_branch
      %49 = sbr.rel (0) target = $region25
    $region24: #{tpu_custom_call.1} parent=1 // pred_region
      %50 = dma.done [#allocation3], 1024
    $region25: #{tpu_custom_call.1} parent=1 // pred_fallthru
      _
    %51 = sfence
    %v52 = vld [vmem:[#allocation8] ss:$8 sm:$0x3]
    %s53 = scalar_lea.vmem [#allocation8], 1
    %v54 = vld [vmem:[%s53] ss:$8 sm:$0x3]
    %s55 = scalar_lea.vmem [#allocation8], 2
    %v56 = vld [vmem:[%s55] ss:$8 sm:$0x3]
    %s57 = scalar_lea.vmem [#allocation8], 3
    %v58 = vld [vmem:[%s57] ss:$8 sm:$0x3]
    %s59 = scalar_lea.vmem [#allocation8], 4
    %v60 = vld [vmem:[%s59] ss:$8 sm:$0x3]
    %s61 = scalar_lea.vmem [#allocation8], 5
    %v62 = vld [vmem:[%s61] ss:$8 sm:$0x3]
    %s63 = scalar_lea.vmem [#allocation8], 6
    %v64 = vld [vmem:[%s63] ss:$8 sm:$0x3]
    %s65 = scalar_lea.vmem [#allocation8], 7
    %v66 = vld [vmem:[%s65] ss:$8 sm:$0x3]
    %s67 = scalar_lea.vmem [#allocation8], 16
    %v68 = vld [vmem:[%s67] ss:$8 sm:$0x3]
    %s69 = scalar_lea.vmem [#allocation8], 17
    %v70 = vld [vmem:[%s69] ss:$8 sm:$0x3]
    %s71 = scalar_lea.vmem [#allocation8], 18
    %v72 = vld [vmem:[%s71] ss:$8 sm:$0x3]
    %s73 = scalar_lea.vmem [#allocation8], 19
    %v74 = vld [vmem:[%s73] ss:$8 sm:$0x3]
    %s75 = scalar_lea.vmem [#allocation8], 20
    %v76 = vld [vmem:[%s75] ss:$8 sm:$0x3]
    %s77 = scalar_lea.vmem [#allocation8], 21
    %v78 = vld [vmem:[%s77] ss:$8 sm:$0x3]
    %s79 = scalar_lea.vmem [#allocation8], 22
    %v80 = vld [vmem:[%s79] ss:$8 sm:$0x3]
    %s81 = scalar_lea.vmem [#allocation8], 23
    %v82 = vld [vmem:[%s81] ss:$8 sm:$0x3]
    %s83 = scalar_lea.vmem [#allocation8], 32
    %v84 = vld [vmem:[%s83] ss:$8 sm:$0x3]
    %s85 = scalar_lea.vmem [#allocation8], 33
    %v86 = vld [vmem:[%s85] ss:$8 sm:$0x3]
    %s87 = scalar_lea.vmem [#allocation8], 34
    %v88 = vld [vmem:[%s87] ss:$8 sm:$0x3]
    %s89 = scalar_lea.vmem [#allocation8], 35
    %v90 = vld [vmem:[%s89] ss:$8 sm:$0x3]
    %s91 = scalar_lea.vmem [#allocation8], 36
    %v92 = vld [vmem:[%s91] ss:$8 sm:$0x3]
    %s93 = scalar_lea.vmem [#allocation8], 37
    %v94 = vld [vmem:[%s93] ss:$8 sm:$0x3]
    %s95 = scalar_lea.vmem [#allocation8], 38
    %v96 = vld [vmem:[%s95] ss:$8 sm:$0x3]
    %s97 = scalar_lea.vmem [#allocation8], 39
    %v98 = vld [vmem:[%s97] ss:$8 sm:$0x3]
    %s99 = scalar_lea.vmem [#allocation8], 48
    %v100 = vld [vmem:[%s99] ss:$8 sm:$0x3]
    %s101 = scalar_lea.vmem [#allocation8], 49
    %v102 = vld [vmem:[%s101] ss:$8 sm:$0x3]
    %s103 = scalar_lea.vmem [#allocation8], 50
    %v104 = vld [vmem:[%s103] ss:$8 sm:$0x3]
    %s105 = sld [smem:[#allocation2]]
    %v106 = vstv %s105
    %v107 = vmul.f32 %v106, %v52
    %s108 = sld [smem:[#allocation2 + $0x1]]
    %v109 = vstv %s108
    %v110 = vmul.f32 %v109, %v54
    %v111 = vadd.f32 %v107, %v110
    %s112 = sld [smem:[#allocation2 + $0x2]]
    %v113 = vstv %s112
    %v114 = vmul.f32 %v113, %v56
    %v115 = vadd.f32 %v111, %v114
    %s116 = sld [smem:[#allocation2 + $0x3]]
    %v117 = vstv %s116
    %v118 = vmul.f32 %v117, %v58
    %v119 = vadd.f32 %v115, %v118
    %s120 = sld [smem:[#allocation2 + $0x4]]
    %v121 = vstv %s120
    %v122 = vmul.f32 %v121, %v60
    %v123 = vadd.f32 %v119, %v122
    %s124 = sld [smem:[#allocation2 + $0x5]]
    %v125 = vstv %s124
    %v126 = vmul.f32 %v125, %v62
    %v127 = vadd.f32 %v123, %v126
    %s128 = sld [smem:[#allocation2 + $0x6]]
    %v129 = vstv %s128
    %v130 = vmul.f32 %v129, %v64
    %v131 = vadd.f32 %v127, %v130
    %s132 = sld [smem:[#allocation2 + $0x7]]
    %v133 = vstv %s132
    %v134 = vmul.f32 %v133, %v66
    %v135 = vadd.f32 %v131, %v134
    %s136 = sld [smem:[#allocation2 + $0x8]]
    %v137 = vstv %s136
    %v138 = vmul.f32 %v137, %v68
    %v139 = vadd.f32 %v135, %v138
    %s140 = sld [smem:[#allocation2 + $0x9]]
    %v141 = vstv %s140
    %v142 = vmul.f32 %v141, %v70
    %v143 = vadd.f32 %v139, %v142
    %s144 = sld [smem:[#allocation2 + $0xa]]
    %v145 = vstv %s144
    %v146 = vmul.f32 %v145, %v72
    %v147 = vadd.f32 %v143, %v146
    %s148 = sld [smem:[#allocation2 + $0xb]]
    %v149 = vstv %s148
    %v150 = vmul.f32 %v149, %v74
    %v151 = vadd.f32 %v147, %v150
    %s152 = sld [smem:[#allocation2 + $0xc]]
    %v153 = vstv %s152
    %v154 = vmul.f32 %v153, %v76
    %v155 = vadd.f32 %v151, %v154
    %s156 = sld [smem:[#allocation2 + $0xd]]
    %v157 = vstv %s156
    %v158 = vmul.f32 %v157, %v78
    %v159 = vadd.f32 %v155, %v158
    %s160 = sld [smem:[#allocation2 + $0xe]]
    %v161 = vstv %s160
    %v162 = vmul.f32 %v161, %v80
    %v163 = vadd.f32 %v159, %v162
    %s164 = sld [smem:[#allocation2 + $0xf]]
    %v165 = vstv %s164
    %v166 = vmul.f32 %v165, %v82
    %v167 = vadd.f32 %v163, %v166
    %s168 = sld [smem:[#allocation2 + $0x10]]
    %v169 = vstv %s168
    %v170 = vmul.f32 %v169, %v84
    %v171 = vadd.f32 %v167, %v170
    %s172 = sld [smem:[#allocation2 + $0x11]]
    %v173 = vstv %s172
    %v174 = vmul.f32 %v173, %v86
    %v175 = vadd.f32 %v171, %v174
    %s176 = sld [smem:[#allocation2 + $0x12]]
    %v177 = vstv %s176
    %v178 = vmul.f32 %v177, %v88
    %v179 = vadd.f32 %v175, %v178
    %s180 = sld [smem:[#allocation2 + $0x13]]
    %v181 = vstv %s180
    %v182 = vmul.f32 %v181, %v90
    %v183 = vadd.f32 %v179, %v182
    %s184 = sld [smem:[#allocation2 + $0x14]]
    %v185 = vstv %s184
    %v186 = vmul.f32 %v185, %v92
    %v187 = vadd.f32 %v183, %v186
    %s188 = sld [smem:[#allocation2 + $0x15]]
    %v189 = vstv %s188
    %v190 = vmul.f32 %v189, %v94
    %v191 = vadd.f32 %v187, %v190
    %s192 = sld [smem:[#allocation2 + $0x16]]
    %v193 = vstv %s192
    %v194 = vmul.f32 %v193, %v96
    %v195 = vadd.f32 %v191, %v194
    %s196 = sld [smem:[#allocation2 + $0x17]]
    %v197 = vstv %s196
    %v198 = vmul.f32 %v197, %v98
    %v199 = vadd.f32 %v195, %v198
    %s200 = sld [smem:[#allocation2 + $0x18]]
    %v201 = vstv %s200
    %v202 = vmul.f32 %v201, %v100
    %v203 = vadd.f32 %v199, %v202
    %s204 = sld [smem:[#allocation2 + $0x19]]
    %v205 = vstv %s204
    %v206 = vmul.f32 %v205, %v102
    %v207 = vadd.f32 %v203, %v206
    %s208 = sld [smem:[#allocation2 + $0x1a]]
    %v209 = vstv %s208
    %v210 = vmul.f32 %v209, %v104
    %v211 = vadd.f32 %v207, %v210
    %s212 = sld [smem:[#allocation7]]
    %v213 = vstv %s212
    %v214 = vadd.f32 %v211, %v213
    %vm215 = vcmp.ge.f32.partialorder %v214, 0.0
    %v216 = vmul.f32 %v214, 0.33
    %v217 = vsel %vm215, %v214, %v216
    %s218 = sld [smem:[#allocation2 + $0x80]]
    %v219 = vstv %s218
    %v220 = vmul.f32 %v219, %v52
    %s221 = sld [smem:[#allocation2 + $0x81]]
    %v222 = vstv %s221
    %v223 = vmul.f32 %v222, %v54
    %v224 = vadd.f32 %v220, %v223
    %s225 = sld [smem:[#allocation2 + $0x82]]
    %v226 = vstv %s225
    %v227 = vmul.f32 %v226, %v56
    %v228 = vadd.f32 %v224, %v227
    %s229 = sld [smem:[#allocation2 + $0x83]]
    %v230 = vstv %s229
    %v231 = vmul.f32 %v230, %v58
    %v232 = vadd.f32 %v228, %v231
    %s233 = sld [smem:[#allocation2 + $0x84]]
    %v234 = vstv %s233
    %v235 = vmul.f32 %v234, %v60
    %v236 = vadd.f32 %v232, %v235
    %s237 = sld [smem:[#allocation2 + $0x85]]
    %v238 = vstv %s237
    %v239 = vmul.f32 %v238, %v62
    %v240 = vadd.f32 %v236, %v239
    %s241 = sld [smem:[#allocation2 + $0x86]]
    %v242 = vstv %s241
    %v243 = vmul.f32 %v242, %v64
    %v244 = vadd.f32 %v240, %v243
    %s245 = sld [smem:[#allocation2 + $0x87]]
    %v246 = vstv %s245
    %v247 = vmul.f32 %v246, %v66
    %v248 = vadd.f32 %v244, %v247
    %s249 = sld [smem:[#allocation2 + $0x88]]
    %v250 = vstv %s249
    %v251 = vmul.f32 %v250, %v68
    %v252 = vadd.f32 %v248, %v251
    %s253 = sld [smem:[#allocation2 + $0x89]]
    %v254 = vstv %s253
    %v255 = vmul.f32 %v254, %v70
    %v256 = vadd.f32 %v252, %v255
    %s257 = sld [smem:[#allocation2 + $0x8a]]
    %v258 = vstv %s257
    %v259 = vmul.f32 %v258, %v72
    %v260 = vadd.f32 %v256, %v259
    %s261 = sld [smem:[#allocation2 + $0x8b]]
    %v262 = vstv %s261
    %v263 = vmul.f32 %v262, %v74
    %v264 = vadd.f32 %v260, %v263
    %s265 = sld [smem:[#allocation2 + $0x8c]]
    %v266 = vstv %s265
    %v267 = vmul.f32 %v266, %v76
    %v268 = vadd.f32 %v264, %v267
    %s269 = sld [smem:[#allocation2 + $0x8d]]
    %v270 = vstv %s269
    %v271 = vmul.f32 %v270, %v78
    %v272 = vadd.f32 %v268, %v271
    %s273 = sld [smem:[#allocation2 + $0x8e]]
    %v274 = vstv %s273
    %v275 = vmul.f32 %v274, %v80
    %v276 = vadd.f32 %v272, %v275
    %s277 = sld [smem:[#allocation2 + $0x8f]]
    %v278 = vstv %s277
    %v279 = vmul.f32 %v278, %v82
    %v280 = vadd.f32 %v276, %v279
    %s281 = sld [smem:[#allocation2 + $0x90]]
    %v282 = vstv %s281
    %v283 = vmul.f32 %v282, %v84
    %v284 = vadd.f32 %v280, %v283
    %s285 = sld [smem:[#allocation2 + $0x91]]
    %v286 = vstv %s285
    %v287 = vmul.f32 %v286, %v86
    %v288 = vadd.f32 %v284, %v287
    %s289 = sld [smem:[#allocation2 + $0x92]]
    %v290 = vstv %s289
    %v291 = vmul.f32 %v290, %v88
    %v292 = vadd.f32 %v288, %v291
    %s293 = sld [smem:[#allocation2 + $0x93]]
    %v294 = vstv %s293
    %v295 = vmul.f32 %v294, %v90
    %v296 = vadd.f32 %v292, %v295
    %s297 = sld [smem:[#allocation2 + $0x94]]
    %v298 = vstv %s297
    %v299 = vmul.f32 %v298, %v92
    %v300 = vadd.f32 %v296, %v299
    %s301 = sld [smem:[#allocation2 + $0x95]]
    %v302 = vstv %s301
    %v303 = vmul.f32 %v302, %v94
    %v304 = vadd.f32 %v300, %v303
    %s305 = sld [smem:[#allocation2 + $0x96]]
    %v306 = vstv %s305
    %v307 = vmul.f32 %v306, %v96
    %v308 = vadd.f32 %v304, %v307
    %s309 = sld [smem:[#allocation2 + $0x97]]
    %v310 = vstv %s309
    %v311 = vmul.f32 %v310, %v98
    %v312 = vadd.f32 %v308, %v311
    %s313 = sld [smem:[#allocation2 + $0x98]]
    %v314 = vstv %s313
    %v315 = vmul.f32 %v314, %v100
    %v316 = vadd.f32 %v312, %v315
    %s317 = sld [smem:[#allocation2 + $0x99]]
    %v318 = vstv %s317
    %v319 = vmul.f32 %v318, %v102
    %v320 = vadd.f32 %v316, %v319
    %s321 = sld [smem:[#allocation2 + $0x9a]]
    %v322 = vstv %s321
    %v323 = vmul.f32 %v322, %v104
    %v324 = vadd.f32 %v320, %v323
    %s325 = sld [smem:[#allocation7 + $0x1]]
    %v326 = vstv %s325
    %v327 = vadd.f32 %v324, %v326
    %vm328 = vcmp.ge.f32.partialorder %v327, 0.0
    %v329 = vmul.f32 %v327, 0.33
    %v330 = vsel %vm328, %v327, %v329
    %v332 = vlaneseq
    %v333 = vshrl.u32 %v332, 7
    %v334 = vsub.s32 0, %v333
    %v335 = vrot.slane %v217, %v334
    %v336 = vlaneseq
    %v337 = vshrl.u32 %v336, 7
    %v338 = vsub.s32 1, %v337
    %v339 = vrot.slane %v217, %v338
    %v343 = vlaneseq
    %v344 = vshrl.u32 %v343, 7
    %v345 = vsub.s32 0, %v344
    %v346 = vrot.slane %v330, %v345
    %v347 = vlaneseq
    %v348 = vshrl.u32 %v347, 7
    %v349 = vsub.s32 1, %v348
    %v350 = vrot.slane %v330, %v349
    %vm353 = vcmask 1040384
    %v354 = vsel %vm353, %v335, %v346
    %v355 = vsel %vm353, %v339, %v350
    %v358 = vcombine.low %v354, %v355
    %v360 = vunpack.c.l.s4 1983009808
    %v361 = vunpack.c.0.s8 %v360
    %v362 = vlaneseq
    %v363 = vshrl.u32 %v362, 7
    %v364 = vsub.s32 %v361, %v363
    %v365 = vrot.slane %v358, %v364
    %367 = vst [vmem:[#allocation9] sm:$0xf] %v365
    // Predicated region
    $region26: #{tpu_custom_call.1} parent=1 // pred_check
      _
    $region27: #{tpu_custom_call.1} parent=1 // pred_check_branch
      %369 = sbr.rel (0) target = $region29
    $region28: #{tpu_custom_call.1} parent=1 // pred_region
      %s371 = ssub.s32 64, 64
      %372 = vsyncadd [#allocation4], %s371
      %s374 = sshll.u32 [#allocation9], 4
      %s375 = int_to_ptr.vmem [resolvable:$true] %s374
      %377 = dma.vmem_to_hbm [thread:$0]  %s375, 64, %s3, [#allocation4]
    $region29: #{tpu_custom_call.1} parent=1 // pred_fallthru
      _
    // Predicated region
    $region30: #{tpu_custom_call.1} parent=1 // pred_check
      _
    $region31: #{tpu_custom_call.1} parent=1 // pred_check_branch
      %379 = sbr.rel (0) target = $region33
    $region32: #{tpu_custom_call.1} parent=1 // pred_region
      %380 = dma.done [#allocation4], 64
    $region33: #{tpu_custom_call.1} parent=1 // pred_fallthru
      _
    %381 = vsyncpa [#allocation3], 1
    %382 = vsyncpa [#allocation4], 1
    %383 = vsyncpa [#allocation5], 1
    %384 = vsyncpa [#allocation6], 1

</llo_original>
